<compile_context>
chip_gen: v7x
topology: tpu7x:2x2x1
jax: 0.10.0
libtpu: 0.0.40
codegen_flags: <defaults>
</compile_context>

<pallas_src>
import functools

import jax
import jax.numpy as jnp
from jax.experimental import pallas as pl
from jax.experimental.pallas import tpu as pltpu

_LANE = 128
_SUBLANE = 8


def _round_up(x, m):
    return (x + m - 1) // m * m


def _conv_bn_relu_kernel(p_ref, w_ref, b_ref, o_ref):
    """One grid step == one row tile of the im2col patch matrix.

    p_ref: (TM, Kp)       bf16 lane-dense patch rows
    w_ref: (Kp, Cout_p)   bf16 BN-folded 2-D weight (constant index -> resident)
    b_ref: (1, Cout_p)    f32  BN-folded bias
    o_ref: (TM, Cout_p)   bf16 output rows (lane-dense, unmasked stores)
    """
    y = jnp.dot(p_ref[...], w_ref[...], preferred_element_type=jnp.float32)
    y = jnp.maximum(y + b_ref[...], 0.0)          # folded-BN bias + ReLU, f32 epilogue
    o_ref[...] = y.astype(o_ref.dtype)


@functools.partial(jax.jit,
                   static_argnames=("stride", "padding", "eps", "row_tile"))
def conv_bn_relu(x_nchw, conv_w, running_mean, running_var, gamma, beta,
                 *, stride=1, padding=1, eps=1e-5, row_tile=256):
    N, Cin, H, W = x_nchw.shape
    Cout, Cin_w, KH, KW = conv_w.shape
    assert Cin == Cin_w
    HO = (H + 2 * padding - KH) // stride + 1
    WO = (W + 2 * padding - KW) // stride + 1

    # ---- Fold inference BatchNorm into the conv weight + per-channel bias ----
    scale = (gamma.astype(jnp.float32) /
             jnp.sqrt(running_var.astype(jnp.float32) + eps))            # (Cout,)
    bias = beta.astype(jnp.float32) - running_mean.astype(jnp.float32) * scale

    K = KH * KW * Cin
    Kp = _round_up(K, _LANE)                      # lane-dense contraction dim
    Cout_p = _round_up(Cout, _LANE)               # lane-dense output dim

    # (Cout, Cin, KH, KW) -> scaled -> (KH, KW, Cin, Cout) -> (K, Cout), zero-pad, bf16
    w = conv_w.astype(jnp.float32) * scale[:, None, None, None]
    w = jnp.transpose(w, (2, 3, 1, 0)).reshape(K, Cout)
    w = jnp.pad(w, ((0, Kp - K), (0, Cout_p - Cout))).astype(jnp.bfloat16)
    bias2 = jnp.pad(bias, (0, Cout_p - Cout)).reshape(1, Cout_p)          # f32

    # ---- bf16 BEFORE transpose/pad; NCHW -> NHWC; spatial zero-pad ----
    x = jnp.transpose(x_nchw.astype(jnp.bfloat16), (0, 2, 3, 1))
    xp = jnp.pad(x, ((0, 0), (padding, padding), (padding, padding), (0, 0)))

    # ---- im2col in the wrapper: (N, HO, WO, KH*KW*Cin), (kh, kw)-major, c-minor ----
    taps = []
    for kh in range(KH):
        for kw in range(KW):
            taps.append(xp[:, kh: kh + (HO - 1) * stride + 1: stride,
                            kw: kw + (WO - 1) * stride + 1: stride, :])
    patches = jnp.concatenate(taps, axis=-1).reshape(N * HO * WO, K)

    # ---- Row tiling: flatten batch into rows, pad to the tile grid ----
    M = N * HO * WO
    TM = min(row_tile, _round_up(M, _SUBLANE))    # multiple of 8 (row_tile is too)
    Mp = _round_up(M, TM)
    patches = jnp.pad(patches, ((0, Mp - M), (0, Kp - K)))

    out = pl.pallas_call(
        _conv_bn_relu_kernel,
        out_shape=jax.ShapeDtypeStruct((Mp, Cout_p), jnp.bfloat16),
        grid_spec=pl.GridSpec(
            grid=(Mp // TM,),
            in_specs=[
                pl.BlockSpec((TM, Kp), lambda i: (i, 0)),          # patch row tile
                pl.BlockSpec((Kp, Cout_p), lambda i: (0, 0)),      # resident weight
                pl.BlockSpec((1, Cout_p), lambda i: (0, 0)),       # resident bias
            ],
            out_specs=pl.BlockSpec((TM, Cout_p), lambda i: (i, 0)),
        ),
        compiler_params=pltpu.CompilerParams(
            # row tiles are independent -> shard across TensorCores (v7x megacore)
            dimension_semantics=("parallel",)),
    )(patches, w, bias2)

    out = out[:M, :Cout].reshape(N, HO, WO, Cout).astype(jnp.float32)
    return jnp.transpose(out, (0, 3, 1, 2))       # back to NCHW


def _reference(x, conv_w, mean, var, gamma, beta, *, stride, padding, eps):
    y = jax.lax.conv_general_dilated(
        x.astype(jnp.float32), conv_w.astype(jnp.float32),
        window_strides=(stride, stride),
        padding=[(padding, padding), (padding, padding)],
        dimension_numbers=("NCHW", "OIHW", "NCHW"))
    bc = lambda v: v[None, :, None, None]
    y = (y - bc(mean)) / jnp.sqrt(bc(var) + eps)
    y = bc(gamma) * y + bc(beta)
    return jnp.maximum(y, 0.0)


if __name__ == "__main__":
    # Module config: ConvBnRelu(in_channels=4, out_channels=8, kernel_size=3,
    #                           stride=1, padding=1, eps=1e-5)
    N, Cin, H, W = 2, 4, 16, 16
    Cout, KS, stride, padding, eps = 8, 3, 1, 1, 1e-5

    key = jax.random.PRNGKey(0)
    k_x, k_w, k_m, k_v, k_g, k_b = jax.random.split(key, 6)

    x = jax.random.normal(k_x, (N, Cin, H, W), dtype=jnp.float32)
    conv_w = 0.1 * jax.random.normal(k_w, (Cout, Cin, KS, KS), dtype=jnp.float32)
    running_mean = 0.05 * jax.random.normal(k_m, (Cout,), dtype=jnp.float32)
    running_var = 1.0 + 0.1 * jnp.abs(jax.random.normal(k_v, (Cout,), dtype=jnp.float32))
    gamma = 1.0 + 0.1 * jax.random.normal(k_g, (Cout,), dtype=jnp.float32)
    beta = 0.1 * jax.random.normal(k_b, (Cout,), dtype=jnp.float32)

    out = conv_bn_relu(x, conv_w, running_mean, running_var, gamma, beta,
                       stride=stride, padding=padding, eps=eps)
    out = jax.block_until_ready(out)

    ref = _reference(x, conv_w, running_mean, running_var, gamma, beta,
                     stride=stride, padding=padding, eps=eps)
    assert out.shape == (N, Cout, H, W)
    # bf16 operands + bf16 output (f32 MXU accumulation) -> relaxed tolerance vs f32.
    assert jnp.allclose(out, ref, atol=3e-2, rtol=3e-2), "mismatch vs reference"

    print("KERNEL_OK")
</pallas_src>

<mosaic_0001>
module attributes {stable_mosaic.version = 11 : i64} {
  func.func @_conv_bn_relu_kernel(%arg0: i32, %arg1: memref<256x128xbf16, #tpu.memory_space<vmem>>, %arg2: memref<128x128xbf16, #tpu.memory_space<vmem>>, %arg3: memref<1x128xf32, #tpu.memory_space<vmem>>, %arg4: memref<256x128xbf16, #tpu.memory_space<vmem>>) attributes {dimension_semantics = [#tpu.dimension_semantics<parallel>], iteration_bounds = array<i64: 2>, scalar_prefetch = 0 : i64, scratch_operands = 0 : i64, tpu.core_type = #tpu.core_type<tc>, window_params = [{transform_indices = @transform_0, window_bounds = array<i64: 256, 128>}, {pipeline_mode = #tpu.pipeline_mode<synchronous>, transform_indices = @transform_1, window_bounds = array<i64: 128, 128>}, {pipeline_mode = #tpu.pipeline_mode<synchronous>, transform_indices = @transform_2, window_bounds = array<i64: 1, 128>}, {transform_indices = @transform_3, window_bounds = array<i64: 256, 128>}]} {
    %c0 = arith.constant 0 : index
    %c0_0 = arith.constant 0 : index
    %0 = vector.load %arg1[%c0, %c0_0] : memref<256x128xbf16, #tpu.memory_space<vmem>>, vector<256x128xbf16>
    %c0_1 = arith.constant 0 : index
    %c0_2 = arith.constant 0 : index
    %1 = vector.load %arg2[%c0_1, %c0_2] : memref<128x128xbf16, #tpu.memory_space<vmem>>, vector<128x128xbf16>
    %cst = arith.constant dense<0.000000e+00> : vector<256x128xf32>
    %2 = tpu.matmul %0, %1, %cst {dimension_numbers = #tpu.dot_dimension_numbers<[1], [0], [0], [1], [0, 0, 1, 1], [], []>} : vector<256x128xbf16>, vector<128x128xbf16>, vector<256x128xf32> -> vector<256x128xf32>
    %c0_3 = arith.constant 0 : index
    %c0_4 = arith.constant 0 : index
    %3 = vector.load %arg3[%c0_3, %c0_4] : memref<1x128xf32, #tpu.memory_space<vmem>>, vector<1x128xf32>
    %4 = vector.broadcast %3 : vector<1x128xf32> to vector<256x128xf32>
    %5 = arith.addf %2, %4 : vector<256x128xf32>
    %cst_5 = arith.constant 0.000000e+00 : f32
    %6 = vector.broadcast %cst_5 : f32 to vector<256x128xf32>
    %7 = arith.maximumf %5, %6 : vector<256x128xf32>
    %8 = arith.truncf %7 : vector<256x128xf32> to vector<256x128xbf16>
    %c0_6 = arith.constant 0 : index
    %c0_7 = arith.constant 0 : index
    %9 = vector.load %arg4[%c0_6, %c0_7] : memref<256x128xbf16, #tpu.memory_space<vmem>>, vector<256x128xbf16>
    tpu.vector_store %arg4[%c0_6, %c0_7], %8 {strides = array<i32>} : memref<256x128xbf16, #tpu.memory_space<vmem>>, vector<256x128xbf16>,
    return
  }
  func.func @transform_0(%arg0: i32) -> (i32, i32) {
    %c0_i32 = arith.constant 0 : i32
    %c0_i32_0 = arith.constant 0 : i32
    return %arg0, %c0_i32 : i32, i32
  }
  func.func @transform_1(%arg0: i32) -> (i32, i32) {
    %c0_i32 = arith.constant 0 : i32
    %c0_i32_0 = arith.constant 0 : i32
    %c0_i32_1 = arith.constant 0 : i32
    return %c0_i32, %c0_i32_0 : i32, i32
  }
  func.func @transform_2(%arg0: i32) -> (i32, i32) {
    %c0_i32 = arith.constant 0 : i32
    %c0_i32_0 = arith.constant 0 : i32
    %c0_i32_1 = arith.constant 0 : i32
    return %c0_i32, %c0_i32_0 : i32, i32
  }
  func.func @transform_3(%arg0: i32) -> (i32, i32) {
    %c0_i32 = arith.constant 0 : i32
    %c0_i32_0 = arith.constant 0 : i32
    return %arg0, %c0_i32 : i32, i32
  }
}

</mosaic_0001>

<llo_original>
// kernel: conv_bn_relu.1
$region0: #{conv_bn_relu.1}
  #allocation0 [shape = 'u32[]', space=smem, size = 0x4, offset = 0x4, fixed_abs, tag = 'smem constant byte address 0x4 - core index']
  #allocation1 [shape = 'u32[144,128]{1,0:T(1,128)}', space=vmem, size = 0x12000, scoped, tag = 'internal scratch']
  %s0 = inlined_call_operand.vmem [shape: bf16[512,128], index: 0, kind: input, shape index: {}]
  %s1 = inlined_call_operand.vmem [shape: bf16[128,128], index: 1, kind: input, shape index: {}]
  %s2 = inlined_call_operand.vmem [shape: f32[1,128], index: 2, kind: input, shape index: {}]
  %s3 = inlined_call_operand.vmem [shape: bf16[512,128], index: 3, kind: output, shape index: {}]
  %s4 = sld [smem:[#allocation0]]
  $region45: #{conv_bn_relu.1} parent=0
    _
  %s6 = ssub.s32 1, %s4
  %s7 = scalar_select 0, %s6, %s4
  loop: start=0, step=1, limit=4
  $region2: #{conv_bn_relu.1} parent=0 // loop_pre_header
    _
  $region3: #{conv_bn_relu.1} parent=0 // loop_header
    %s9 = sphi 0, %s13
    %p10 = scmp.ge.s32.totalorder %s9, 4
    %s19 = sphi 0, %s21
    %s22 = sphi 0, %s19
    %s23 = sphi 0, %s22
    %s39 = sphi 0, %s23
    %s43 = sphi 0, %s43
    %s45 = sphi 0, %s43
    %s46 = sphi 0, %s45
    %s60 = sphi 0, %s46
    %s64 = sphi 0, %s64
    %s66 = sphi 0, %s64
    %s67 = sphi 0, %s66
    %s81 = sphi 0, %s67
    %s87 = sphi 0, %s89
    %s90 = sphi 0, %s87
    %s91 = sphi 0, %s90
    %s107 = sphi 0, %s91
  $region4: #{conv_bn_relu.1} parent=0 // loop_header_branch
    %12 = sbr.rel (%p10) target = $region8
  $region5: #{conv_bn_relu.1} parent=0 // loop_body
    %s14 = ssub.s32 %s9, 1
    %s15 = ssub.s32 %s9, 2
    %s16 = sadd.s32 %s9, 1
    %s17 = ssub.s32 %s9, %s16
    %p18 = scmp.eq.s32.totalorder %s17, 0
    %s20 = sadd.s32 %s19, 1
    %s21 = scalar_select %p18, %s19, %s20
    %p24 = pneg %p18
    %p25 = scmp.eq.s32.totalorder %s9, 1
    %p26 = por %p24, %p25
    %p27 = scmp.ne.s32.totalorder %s19, %s22
    %p28 = scmp.eq.s32.totalorder %s9, 0
    %p29 = por %p27, %p28
    %p30 = scmp.ne.s32.totalorder %s19, %s22
    %p31 = scmp.eq.s32.totalorder %s14, 1
    %p32 = por %p30, %p31
    %p33 = scmp.ne.s32.totalorder %s22, %s23
    %p34 = scmp.eq.s32.totalorder %s14, 0
    %p35 = por %p33, %p34
    %p36 = scmp.ne.s32.totalorder %s22, %s23
    %p37 = scmp.eq.s32.totalorder %s15, 1
    %p38 = por %p36, %p37
    %p40 = scmp.ne.s32.totalorder %s23, %s39
    %p41 = scmp.eq.s32.totalorder %s15, 0
    %p42 = por %p40, %p41
    %s44 = sadd.s32 %s43, 1
    %p47 = scmp.eq.s32.totalorder %s9, 1
    %p48 = scmp.ne.s32.totalorder %s43, %s45
    %p49 = scmp.eq.s32.totalorder %s9, 0
    %p50 = por %p48, %p49
    %p51 = scmp.ne.s32.totalorder %s43, %s45
    %p52 = scmp.eq.s32.totalorder %s14, 1
    %p53 = por %p51, %p52
    %p54 = scmp.ne.s32.totalorder %s45, %s46
    %p55 = scmp.eq.s32.totalorder %s14, 0
    %p56 = por %p54, %p55
    %p57 = scmp.ne.s32.totalorder %s45, %s46
    %p58 = scmp.eq.s32.totalorder %s15, 1
    %p59 = por %p57, %p58
    %p61 = scmp.ne.s32.totalorder %s46, %s60
    %p62 = scmp.eq.s32.totalorder %s15, 0
    %p63 = por %p61, %p62
    %s65 = sadd.s32 %s64, 1
    %p68 = scmp.eq.s32.totalorder %s9, 1
    %p69 = scmp.ne.s32.totalorder %s64, %s66
    %p70 = scmp.eq.s32.totalorder %s9, 0
    %p71 = por %p69, %p70
    %p72 = scmp.ne.s32.totalorder %s64, %s66
    %p73 = scmp.eq.s32.totalorder %s14, 1
    %p74 = por %p72, %p73
    %p75 = scmp.ne.s32.totalorder %s66, %s67
    %p76 = scmp.eq.s32.totalorder %s14, 0
    %p77 = por %p75, %p76
    %p78 = scmp.ne.s32.totalorder %s66, %s67
    %p79 = scmp.eq.s32.totalorder %s15, 1
    %p80 = por %p78, %p79
    %p82 = scmp.ne.s32.totalorder %s67, %s81
    %p83 = scmp.eq.s32.totalorder %s15, 0
    %p84 = por %p82, %p83
    %s85 = ssub.s32 %s9, %s16
    %p86 = scmp.eq.s32.totalorder %s85, 0
    %s88 = sadd.s32 %s87, 1
    %s89 = scalar_select %p86, %s87, %s88
    %p92 = pneg %p86
    %p93 = scmp.eq.s32.totalorder %s9, 1
    %p94 = por %p92, %p93
    %p95 = scmp.ne.s32.totalorder %s87, %s90
    %p96 = scmp.eq.s32.totalorder %s9, 0
    %p97 = por %p95, %p96
    %p98 = scmp.ne.s32.totalorder %s87, %s90
    %p99 = scmp.eq.s32.totalorder %s14, 1
    %p100 = por %p98, %p99
    %p101 = scmp.ne.s32.totalorder %s90, %s91
    %p102 = scmp.eq.s32.totalorder %s14, 0
    %p103 = por %p101, %p102
    %p104 = scmp.ne.s32.totalorder %s90, %s91
    %p105 = scmp.eq.s32.totalorder %s15, 1
    %p106 = por %p104, %p105
    %p108 = scmp.ne.s32.totalorder %s91, %s107
    %p109 = scmp.eq.s32.totalorder %s15, 0
    %p110 = por %p108, %p109
    %p111 = scmp.le.s32.totalorder 1, %s9
    %p112 = scmp.lt.s32.totalorder %s9, 3
    %p113 = pnand %p111, %p112
    %p114 = pneg %p113
    // Predicated region
    $region9: #{conv_bn_relu.1} parent=5 // pred_check
      _
    $region10: #{conv_bn_relu.1} parent=5 // pred_check_branch
      %116 = sbr.rel (%p113) target = $region12
    $region11: #{conv_bn_relu.1} parent=5 // pred_region
      %s117 = ssub.s32 %s9, 1
      // Predicated region
      $region13: #{conv_bn_relu.1} parent=11 // pred_check
        %p118 = pneg %p56
      $region14: #{conv_bn_relu.1} parent=11 // pred_check_branch
        %120 = sbr.rel (%p118) target = $region16
      $region15: #{conv_bn_relu.1} parent=11 // pred_region
        _
      $region16: #{conv_bn_relu.1} parent=11 // pred_fallthru
        _
      // Predicated region
      $region17: #{conv_bn_relu.1} parent=11 // pred_check
        %p121 = pneg %p77
      $region18: #{conv_bn_relu.1} parent=11 // pred_check_branch
        %123 = sbr.rel (%p121) target = $region20
      $region19: #{conv_bn_relu.1} parent=11 // pred_region
        _
      $region20: #{conv_bn_relu.1} parent=11 // pred_fallthru
        _
    $region12: #{conv_bn_relu.1} parent=5 // pred_fallthru
      _
    %p124 = scmp.lt.s32.totalorder %s9, 2
    // Predicated region
    $region21: #{conv_bn_relu.1} parent=5 // pred_check
      %p125 = pneg %p124
    $region22: #{conv_bn_relu.1} parent=5 // pred_check_branch
      %127 = sbr.rel (%p125) target = $region24
    $region23: #{conv_bn_relu.1} parent=5 // pred_region
      // Predicated region
      $region25: #{conv_bn_relu.1} parent=23 // pred_check
        %p128 = pneg %p29
      $region26: #{conv_bn_relu.1} parent=23 // pred_check_branch
        %130 = sbr.rel (%p128) target = $region28
      $region27: #{conv_bn_relu.1} parent=23 // pred_region
        %s131 = smul.u32 32, %s9
        %p132 = scmp.lt.s32.totalorder %s131, 63
        %s133 = scalar_select %p132, %s131, 63
        %s134 = smul.addr %s133, 4
        %s135 = scalar_lea.vmem %s0, %s134
        %s136 = smul.u32 32, %s9
      $region28: #{conv_bn_relu.1} parent=23 // pred_fallthru
        _
    $region24: #{conv_bn_relu.1} parent=5 // pred_fallthru
      _
    %p137 = scmp.le.s32.totalorder 1, %s9
    %p138 = scmp.lt.s32.totalorder %s9, 3
    %p139 = pnand %p137, %p138
    %p140 = pneg %p139
    // Predicated region
    $region29: #{conv_bn_relu.1} parent=5 // pred_check
      _
    $region30: #{conv_bn_relu.1} parent=5 // pred_check_branch
      %142 = sbr.rel (%p139) target = $region32
    $region31: #{conv_bn_relu.1} parent=5 // pred_region
      %s143 = ssub.s32 %s9, 1
      %s144 = smul.u32 32, %s14
      %p145 = scmp.lt.s32.totalorder %s144, 63
      %s146 = scalar_select %p145, %s144, 63
      %s147 = smul.addr %s146, 4
      %s148 = scalar_lea.vmem %s0, %s147
      %p149 = pneg %p35
      %p150 = pneg %p32
      %p151 = pneg %p56
      %p152 = pneg %p53
      %p153 = pneg %p77
      %p154 = pneg %p74
      %p155 = pneg %p103
      %p156 = pneg %p100
      %s157 = smul.u32 32, %s14
      %p158 = scmp.lt.s32.totalorder %s157, 63
      %s159 = scalar_select %p158, %s157, 63
      %s160 = smul.addr %s159, 4
      %s161 = scalar_lea.vmem %s3, %s160
      %s162 = smul.u32 32, %s14
      %p163 = scmp.lt.s32.totalorder %s162, 63
      %s164 = scalar_select %p163, %s162, 63
      %s165 = smul.addr %s164, 4
      %s166 = scalar_lea.vmem %s0, %s165
      %s167 = smul.u32 32, %s14
      %s168 = smul.u32 32, %s14
      %p169 = scmp.lt.s32.totalorder %s168, 63
      %s170 = scalar_select %p169, %s168, 63
      %s171 = smul.addr %s170, 4
      %s172 = scalar_lea.vmem %s3, %s171
      %s173 = smul.u32 32, %s14
      %v175 = vld [vmem:[%s166] sm:$0xf]
      %v176 = vld [vmem:[%s166 + $0x4] sm:$0xf]
      %v177 = vld [vmem:[%s166 + $0x8] sm:$0xf]
      %v178 = vld [vmem:[%s166 + $0xc] sm:$0xf]
      %v179 = vld [vmem:[%s166 + $0x10] sm:$0xf]
      %v180 = vld [vmem:[%s166 + $0x14] sm:$0xf]
      %v181 = vld [vmem:[%s166 + $0x18] sm:$0xf]
      %v182 = vld [vmem:[%s166 + $0x1c] sm:$0xf]
      %v183 = vld [vmem:[%s166 + $0x20] sm:$0xf]
      %v184 = vld [vmem:[%s166 + $0x24] sm:$0xf]
      %v185 = vld [vmem:[%s166 + $0x28] sm:$0xf]
      %v186 = vld [vmem:[%s166 + $0x2c] sm:$0xf]
      %v187 = vld [vmem:[%s166 + $0x30] sm:$0xf]
      %v188 = vld [vmem:[%s166 + $0x34] sm:$0xf]
      %v189 = vld [vmem:[%s166 + $0x38] sm:$0xf]
      %v190 = vld [vmem:[%s166 + $0x3c] sm:$0xf]
      %v191 = vld [vmem:[%s166 + $0x40] sm:$0xf]
      %v192 = vld [vmem:[%s166 + $0x44] sm:$0xf]
      %v193 = vld [vmem:[%s166 + $0x48] sm:$0xf]
      %v194 = vld [vmem:[%s166 + $0x4c] sm:$0xf]
      %v195 = vld [vmem:[%s166 + $0x50] sm:$0xf]
      %v196 = vld [vmem:[%s166 + $0x54] sm:$0xf]
      %v197 = vld [vmem:[%s166 + $0x58] sm:$0xf]
      %v198 = vld [vmem:[%s166 + $0x5c] sm:$0xf]
      %v199 = vld [vmem:[%s166 + $0x60] sm:$0xf]
      %v200 = vld [vmem:[%s166 + $0x64] sm:$0xf]
      %v201 = vld [vmem:[%s166 + $0x68] sm:$0xf]
      %v202 = vld [vmem:[%s166 + $0x6c] sm:$0xf]
      %v203 = vld [vmem:[%s166 + $0x70] sm:$0xf]
      %v204 = vld [vmem:[%s166 + $0x74] sm:$0xf]
      %v205 = vld [vmem:[%s166 + $0x78] sm:$0xf]
      %v206 = vld [vmem:[%s166 + $0x7c] sm:$0xf]
      %v207 = vld [vmem:[%s1] sm:$0xf]
      %v208 = vld [vmem:[%s1 + $0x4] sm:$0xf]
      %v209 = vld [vmem:[%s1 + $0x8] sm:$0xf]
      %v210 = vld [vmem:[%s1 + $0xc] sm:$0xf]
      %v211 = vld [vmem:[%s1 + $0x10] sm:$0xf]
      %v212 = vld [vmem:[%s1 + $0x14] sm:$0xf]
      %v213 = vld [vmem:[%s1 + $0x18] sm:$0xf]
      %v214 = vld [vmem:[%s1 + $0x1c] sm:$0xf]
      %v215 = vld [vmem:[%s1 + $0x20] sm:$0xf]
      %v216 = vld [vmem:[%s1 + $0x24] sm:$0xf]
      %v217 = vld [vmem:[%s1 + $0x28] sm:$0xf]
      %v218 = vld [vmem:[%s1 + $0x2c] sm:$0xf]
      %v219 = vld [vmem:[%s1 + $0x30] sm:$0xf]
      %v220 = vld [vmem:[%s1 + $0x34] sm:$0xf]
      %v221 = vld [vmem:[%s1 + $0x38] sm:$0xf]
      %v222 = vld [vmem:[%s1 + $0x3c] sm:$0xf]
      %v223 = vld [vmem:[%s2] sm:$0x1]
      %v225 = vlaneseq
      %v226 = vshrl.u32 %v225, 7
      %v227 = vsub.s32 0, %v226
      %v228 = vrot.slane %v223, %v227
      %v262 = vunpack.c.l.b16 %v175
      %v263 = vunpack.c.l.b16 %v176
      %v264 = vunpack.c.l.b16 %v177
      %v265 = vunpack.c.l.b16 %v178
      %v266 = vunpack.c.l.b16 %v179
      %v267 = vunpack.c.l.b16 %v180
      %v268 = vunpack.c.l.b16 %v181
      %v269 = vunpack.c.l.b16 %v182
      %v270 = vunpack.c.l.b16 %v183
      %v271 = vunpack.c.l.b16 %v184
      %v272 = vunpack.c.l.b16 %v185
      %v273 = vunpack.c.l.b16 %v186
      %v274 = vunpack.c.l.b16 %v187
      %v275 = vunpack.c.l.b16 %v188
      %v276 = vunpack.c.l.b16 %v189
      %v277 = vunpack.c.l.b16 %v190
      %v278 = vunpack.c.l.b16 %v191
      %v279 = vunpack.c.l.b16 %v192
      %v280 = vunpack.c.l.b16 %v193
      %v281 = vunpack.c.l.b16 %v194
      %v282 = vunpack.c.l.b16 %v195
      %v283 = vunpack.c.l.b16 %v196
      %v284 = vunpack.c.l.b16 %v197
      %v285 = vunpack.c.l.b16 %v198
      %v286 = vunpack.c.l.b16 %v199
      %v287 = vunpack.c.l.b16 %v200
      %v288 = vunpack.c.l.b16 %v201
      %v289 = vunpack.c.l.b16 %v202
      %v290 = vunpack.c.l.b16 %v203
      %v291 = vunpack.c.l.b16 %v204
      %v292 = vunpack.c.l.b16 %v205
      %v293 = vunpack.c.l.b16 %v206
      %v294 = vpack.c.b16 %v263, %v262
      %v295 = vpack.c.b16 %v265, %v264
      %v296 = vpack.c.b16 %v267, %v266
      %v297 = vpack.c.b16 %v269, %v268
      %v298 = vpack.c.b16 %v271, %v270
      %v299 = vpack.c.b16 %v273, %v272
      %v300 = vpack.c.b16 %v275, %v274
      %v301 = vpack.c.b16 %v277, %v276
      %v302 = vpack.c.b16 %v279, %v278
      %v303 = vpack.c.b16 %v281, %v280
      %v304 = vpack.c.b16 %v283, %v282
      %v305 = vpack.c.b16 %v285, %v284
      %v306 = vpack.c.b16 %v287, %v286
      %v307 = vpack.c.b16 %v289, %v288
      %v308 = vpack.c.b16 %v291, %v290
      %v309 = vpack.c.b16 %v293, %v292
      %v342 = vunpack.c.l.b16 %v207
      %v343 = vunpack.c.l.b16 %v208
      %v344 = vunpack.c.l.b16 %v209
      %v345 = vunpack.c.l.b16 %v210
      %v346 = vunpack.c.l.b16 %v211
      %v347 = vunpack.c.l.b16 %v212
      %v348 = vunpack.c.l.b16 %v213
      %v349 = vunpack.c.l.b16 %v214
      %v350 = vunpack.c.l.b16 %v215
      %v351 = vunpack.c.l.b16 %v216
      %v352 = vunpack.c.l.b16 %v217
      %v353 = vunpack.c.l.b16 %v218
      %v354 = vunpack.c.l.b16 %v219
      %v355 = vunpack.c.l.b16 %v220
      %v356 = vunpack.c.l.b16 %v221
      %v357 = vunpack.c.l.b16 %v222
      %v358 = vpack.c.b16 %v343, %v342
      %v359 = vpack.c.b16 %v345, %v344
      %v360 = vpack.c.b16 %v347, %v346
      %v361 = vpack.c.b16 %v349, %v348
      %v362 = vpack.c.b16 %v351, %v350
      %v363 = vpack.c.b16 %v353, %v352
      %v364 = vpack.c.b16 %v355, %v354
      %v365 = vpack.c.b16 %v357, %v356
      %374 = vmatprep.subr.bf16.mxu0 0
      %375 = vmatpush1.bf16.msra.mxu0 %v358
      %376 = vmatprep.subr.bf16.mxu0 0
      %377 = vmatpush1.bf16.msra.mxu0 %v359
      %378 = vmatprep.subr.bf16.mxu0 0
      %379 = vmatpush1.bf16.msra.mxu0 %v360
      %380 = vmatprep.subr.bf16.mxu0 0
      %381 = vmatpush1.bf16.msra.mxu0 %v361
      %382 = vmatprep.subr.bf16.mxu0 0
      %383 = vmatpush1.bf16.msra.mxu0 %v362
      %384 = vmatprep.subr.bf16.mxu0 0
      %385 = vmatpush1.bf16.msra.mxu0 %v363
      %386 = vmatprep.subr.bf16.mxu0 0
      %387 = vmatpush1.bf16.msra.mxu0 %v364
      %388 = vmatprep.subr.bf16.mxu0 0
      %389 = vmatpush1.bf16.msra.mxu0 %v365
      %390 = vmatprep.subr.bf16.mxu0 0
      %391 = vmatpush1.bf16.msra.mxu0 0
      %392 = vmatprep.subr.bf16.mxu0 0
      %393 = vmatpush1.bf16.msra.mxu0 0
      %394 = vmatprep.subr.bf16.mxu0 0
      %395 = vmatpush1.bf16.msra.mxu0 0
      %396 = vmatprep.subr.bf16.mxu0 0
      %397 = vmatpush1.bf16.msra.mxu0 0
      %398 = vmatprep.subr.bf16.mxu0 0
      %399 = vmatpush1.bf16.msra.mxu0 0
      %400 = vmatprep.subr.bf16.mxu0 0
      %401 = vmatpush1.bf16.msra.mxu0 0
      %402 = vmatprep.subr.bf16.mxu0 0
      %403 = vmatpush1.bf16.msra.mxu0 0
      %404 = vmatprep.subr.bf16.mxu0 0
      %405 = vmatpush1.bf16.msra.mxu0 0
      %406 = vmatprep.mubr.bf16.mxu0 0
      %407 = vmatmul.mubr.bf16.gmra.mrb[0].mxu0 %v294
      %v408 = vpop.f32.mrb[0].mxu0
      %v409 = vadd.f32 %v228, %v408
      %v410 = vpop.f32.mrb[0].mxu0
      %v411 = vpop.f32.mrb[0].mxu0
      %v412 = vadd.f32 %v228, %v411
      %v413 = vpop.f32.mrb[0].mxu0
      %414 = vmatprep.mubr.bf16.mxu0 0
      %415 = vmatmul.mubr.bf16.gmra.mrb[0].mxu0 %v295
      %v416 = vpop.f32.mrb[0].mxu0
      %v417 = vadd.f32 %v228, %v416
      %v418 = vpop.f32.mrb[0].mxu0
      %v419 = vpop.f32.mrb[0].mxu0
      %v420 = vadd.f32 %v228, %v419
      %v421 = vpop.f32.mrb[0].mxu0
      %422 = vmatprep.mubr.bf16.mxu0 0
      %423 = vmatmul.mubr.bf16.gmra.mrb[0].mxu0 %v296
      %v424 = vpop.f32.mrb[0].mxu0
      %v425 = vadd.f32 %v228, %v424
      %v426 = vpop.f32.mrb[0].mxu0
      %v427 = vpop.f32.mrb[0].mxu0
      %v428 = vadd.f32 %v228, %v427
      %v429 = vpop.f32.mrb[0].mxu0
      %430 = vmatprep.mubr.bf16.mxu0 0
      %431 = vmatmul.mubr.bf16.gmra.mrb[0].mxu0 %v297
      %v432 = vpop.f32.mrb[0].mxu0
      %v433 = vadd.f32 %v228, %v432
      %v434 = vpop.f32.mrb[0].mxu0
      %v435 = vpop.f32.mrb[0].mxu0
      %v436 = vadd.f32 %v228, %v435
      %v437 = vpop.f32.mrb[0].mxu0
      %438 = vmatprep.mubr.bf16.mxu0 0
      %439 = vmatmul.mubr.bf16.gmra.mrb[0].mxu0 %v298
      %v440 = vpop.f32.mrb[0].mxu0
      %v441 = vadd.f32 %v228, %v440
      %v442 = vpop.f32.mrb[0].mxu0
      %v443 = vpop.f32.mrb[0].mxu0
      %v444 = vadd.f32 %v228, %v443
      %v445 = vpop.f32.mrb[0].mxu0
      %446 = vmatprep.mubr.bf16.mxu0 0
      %447 = vmatmul.mubr.bf16.gmra.mrb[0].mxu0 %v299
      %v448 = vpop.f32.mrb[0].mxu0
      %v449 = vadd.f32 %v228, %v448
      %v450 = vpop.f32.mrb[0].mxu0
      %v451 = vpop.f32.mrb[0].mxu0
      %v452 = vadd.f32 %v228, %v451
      %v453 = vpop.f32.mrb[0].mxu0
      %454 = vmatprep.mubr.bf16.mxu0 0
      %455 = vmatmul.mubr.bf16.gmra.mrb[0].mxu0 %v300
      %v456 = vpop.f32.mrb[0].mxu0
      %v457 = vadd.f32 %v228, %v456
      %v458 = vpop.f32.mrb[0].mxu0
      %v459 = vpop.f32.mrb[0].mxu0
      %v460 = vadd.f32 %v228, %v459
      %v461 = vpop.f32.mrb[0].mxu0
      %462 = vmatprep.mubr.bf16.mxu0 0
      %463 = vmatmul.mubr.bf16.gmra.mrb[0].mxu0 %v301
      %v464 = vpop.f32.mrb[0].mxu0
      %v465 = vadd.f32 %v228, %v464
      %v466 = vpop.f32.mrb[0].mxu0
      %v467 = vpop.f32.mrb[0].mxu0
      %v468 = vadd.f32 %v228, %v467
      %v469 = vpop.f32.mrb[0].mxu0
      %470 = vmatprep.mubr.bf16.mxu0 0
      %471 = vmatmul.mubr.bf16.gmra.mrb[0].mxu0 %v302
      %v472 = vpop.f32.mrb[0].mxu0
      %v473 = vadd.f32 %v228, %v472
      %v474 = vpop.f32.mrb[0].mxu0
      %v475 = vpop.f32.mrb[0].mxu0
      %v476 = vadd.f32 %v228, %v475
      %v477 = vpop.f32.mrb[0].mxu0
      %478 = vmatprep.mubr.bf16.mxu0 0
      %479 = vmatmul.mubr.bf16.gmra.mrb[0].mxu0 %v303
      %v480 = vpop.f32.mrb[0].mxu0
      %v481 = vadd.f32 %v228, %v480
      %v482 = vpop.f32.mrb[0].mxu0
      %v483 = vpop.f32.mrb[0].mxu0
      %v484 = vadd.f32 %v228, %v483
      %v485 = vpop.f32.mrb[0].mxu0
      %486 = vmatprep.mubr.bf16.mxu0 0
      %487 = vmatmul.mubr.bf16.gmra.mrb[0].mxu0 %v304
      %v488 = vpop.f32.mrb[0].mxu0
      %v489 = vadd.f32 %v228, %v488
      %v490 = vpop.f32.mrb[0].mxu0
      %v491 = vpop.f32.mrb[0].mxu0
      %v492 = vadd.f32 %v228, %v491
      %v493 = vpop.f32.mrb[0].mxu0
      %494 = vmatprep.mubr.bf16.mxu0 0
      %495 = vmatmul.mubr.bf16.gmra.mrb[0].mxu0 %v305
      %v496 = vpop.f32.mrb[0].mxu0
      %v497 = vadd.f32 %v228, %v496
      %v498 = vpop.f32.mrb[0].mxu0
      %v499 = vpop.f32.mrb[0].mxu0
      %v500 = vadd.f32 %v228, %v499
      %v501 = vpop.f32.mrb[0].mxu0
      %502 = vmatprep.mubr.bf16.mxu0 0
      %503 = vmatmul.mubr.bf16.gmra.mrb[0].mxu0 %v306
      %v504 = vpop.f32.mrb[0].mxu0
      %v505 = vadd.f32 %v228, %v504
      %v506 = vpop.f32.mrb[0].mxu0
      %v507 = vpop.f32.mrb[0].mxu0
      %v508 = vadd.f32 %v228, %v507
      %v509 = vpop.f32.mrb[0].mxu0
      %510 = vmatprep.mubr.bf16.mxu0 0
      %511 = vmatmul.mubr.bf16.gmra.mrb[0].mxu0 %v307
      %v512 = vpop.f32.mrb[0].mxu0
      %v513 = vadd.f32 %v228, %v512
      %v514 = vpop.f32.mrb[0].mxu0
      %v515 = vpop.f32.mrb[0].mxu0
      %v516 = vadd.f32 %v228, %v515
      %v517 = vpop.f32.mrb[0].mxu0
      %518 = vmatprep.mubr.bf16.mxu0 0
      %519 = vmatmul.mubr.bf16.gmra.mrb[0].mxu0 %v308
      %v520 = vpop.f32.mrb[0].mxu0
      %v521 = vadd.f32 %v228, %v520
      %v522 = vpop.f32.mrb[0].mxu0
      %v523 = vpop.f32.mrb[0].mxu0
      %v524 = vadd.f32 %v228, %v523
      %v525 = vpop.f32.mrb[0].mxu0
      %526 = vmatprep.mubr.bf16.mxu0 0
      %527 = vmatmul.mubr.bf16.gmra.mrb[0].mxu0 %v309
      %v528 = vpop.f32.mrb[0].mxu0
      %v529 = vadd.f32 %v228, %v528
      %v530 = vpop.f32.mrb[0].mxu0
      %v531 = vpop.f32.mrb[0].mxu0
      %v532 = vadd.f32 %v228, %v531
      %v533 = vpop.f32.mrb[0].mxu0
      %534 = vdwg.mxu0
      %v535 = vmax.f32 %v409, 0.0
      %v536 = vmax.f32 %v412, 0.0
      %v537 = vmax.f32 %v417, 0.0
      %v538 = vmax.f32 %v420, 0.0
      %v539 = vmax.f32 %v425, 0.0
      %v540 = vmax.f32 %v428, 0.0
      %v541 = vmax.f32 %v433, 0.0
      %v542 = vmax.f32 %v436, 0.0
      %v543 = vmax.f32 %v441, 0.0
      %v544 = vmax.f32 %v444, 0.0
      %v545 = vmax.f32 %v449, 0.0
      %v546 = vmax.f32 %v452, 0.0
      %v547 = vmax.f32 %v457, 0.0
      %v548 = vmax.f32 %v460, 0.0
      %v549 = vmax.f32 %v465, 0.0
      %v550 = vmax.f32 %v468, 0.0
      %v551 = vmax.f32 %v473, 0.0
      %v552 = vmax.f32 %v476, 0.0
      %v553 = vmax.f32 %v481, 0.0
      %v554 = vmax.f32 %v484, 0.0
      %v555 = vmax.f32 %v489, 0.0
      %v556 = vmax.f32 %v492, 0.0
      %v557 = vmax.f32 %v497, 0.0
      %v558 = vmax.f32 %v500, 0.0
      %v559 = vmax.f32 %v505, 0.0
      %v560 = vmax.f32 %v508, 0.0
      %v561 = vmax.f32 %v513, 0.0
      %v562 = vmax.f32 %v516, 0.0
      %v563 = vmax.f32 %v521, 0.0
      %v564 = vmax.f32 %v524, 0.0
      %v565 = vmax.f32 %v529, 0.0
      %v566 = vmax.f32 %v532, 0.0
      %v567 = vpack.c.bf16 %v536, %v535
      %v568 = vpack.c.bf16 %v538, %v537
      %v569 = vpack.c.bf16 %v540, %v539
      %v570 = vpack.c.bf16 %v542, %v541
      %v571 = vpack.c.bf16 %v544, %v543
      %v572 = vpack.c.bf16 %v546, %v545
      %v573 = vpack.c.bf16 %v548, %v547
      %v574 = vpack.c.bf16 %v550, %v549
      %v575 = vpack.c.bf16 %v552, %v551
      %v576 = vpack.c.bf16 %v554, %v553
      %v577 = vpack.c.bf16 %v556, %v555
      %v578 = vpack.c.bf16 %v558, %v557
      %v579 = vpack.c.bf16 %v560, %v559
      %v580 = vpack.c.bf16 %v562, %v561
      %v581 = vpack.c.bf16 %v564, %v563
      %v582 = vpack.c.bf16 %v566, %v565
      %v599 = vunpack.c.l.b16 %v567
      %v600 = vunpack.c.h.b16 %v567
      %v601 = vunpack.c.l.b16 %v568
      %v602 = vunpack.c.h.b16 %v568
      %v603 = vunpack.c.l.b16 %v569
      %v604 = vunpack.c.h.b16 %v569
      %v605 = vunpack.c.l.b16 %v570
      %v606 = vunpack.c.h.b16 %v570
      %v607 = vunpack.c.l.b16 %v571
      %v608 = vunpack.c.h.b16 %v571
      %v609 = vunpack.c.l.b16 %v572
      %v610 = vunpack.c.h.b16 %v572
      %v611 = vunpack.c.l.b16 %v573
      %v612 = vunpack.c.h.b16 %v573
      %v613 = vunpack.c.l.b16 %v574
      %v614 = vunpack.c.h.b16 %v574
      %v615 = vunpack.c.l.b16 %v575
      %v616 = vunpack.c.h.b16 %v575
      %v617 = vunpack.c.l.b16 %v576
      %v618 = vunpack.c.h.b16 %v576
      %v619 = vunpack.c.l.b16 %v577
      %v620 = vunpack.c.h.b16 %v577
      %v621 = vunpack.c.l.b16 %v578
      %v622 = vunpack.c.h.b16 %v578
      %v623 = vunpack.c.l.b16 %v579
      %v624 = vunpack.c.h.b16 %v579
      %v625 = vunpack.c.l.b16 %v580
      %v626 = vunpack.c.h.b16 %v580
      %v627 = vunpack.c.l.b16 %v581
      %v628 = vunpack.c.h.b16 %v581
      %v629 = vunpack.c.l.b16 %v582
      %v630 = vunpack.c.h.b16 %v582
      %v631 = vpack.c.b16 %v599, %v599
      %v632 = vpack.c.b16 %v600, %v600
      %v633 = vpack.c.b16 %v601, %v601
      %v634 = vpack.c.b16 %v602, %v602
      %v635 = vpack.c.b16 %v603, %v603
      %v636 = vpack.c.b16 %v604, %v604
      %v637 = vpack.c.b16 %v605, %v605
      %v638 = vpack.c.b16 %v606, %v606
      %v639 = vpack.c.b16 %v607, %v607
      %v640 = vpack.c.b16 %v608, %v608
      %v641 = vpack.c.b16 %v609, %v609
      %v642 = vpack.c.b16 %v610, %v610
      %v643 = vpack.c.b16 %v611, %v611
      %v644 = vpack.c.b16 %v612, %v612
      %v645 = vpack.c.b16 %v613, %v613
      %v646 = vpack.c.b16 %v614, %v614
      %v647 = vpack.c.b16 %v615, %v615
      %v648 = vpack.c.b16 %v616, %v616
      %v649 = vpack.c.b16 %v617, %v617
      %v650 = vpack.c.b16 %v618, %v618
      %v651 = vpack.c.b16 %v619, %v619
      %v652 = vpack.c.b16 %v620, %v620
      %v653 = vpack.c.b16 %v621, %v621
      %v654 = vpack.c.b16 %v622, %v622
      %v655 = vpack.c.b16 %v623, %v623
      %v656 = vpack.c.b16 %v624, %v624
      %v657 = vpack.c.b16 %v625, %v625
      %v658 = vpack.c.b16 %v626, %v626
      %v659 = vpack.c.b16 %v627, %v627
      %v660 = vpack.c.b16 %v628, %v628
      %v661 = vpack.c.b16 %v629, %v629
      %v662 = vpack.c.b16 %v630, %v630
      %695 = vst [vmem:[%s172] sm:$0xf] %v631
      %696 = vst [vmem:[%s172 + $0x4] sm:$0xf] %v632
      %697 = vst [vmem:[%s172 + $0x8] sm:$0xf] %v633
      %698 = vst [vmem:[%s172 + $0xc] sm:$0xf] %v634
      %699 = vst [vmem:[%s172 + $0x10] sm:$0xf] %v635
      %700 = vst [vmem:[%s172 + $0x14] sm:$0xf] %v636
      %701 = vst [vmem:[%s172 + $0x18] sm:$0xf] %v637
      %702 = vst [vmem:[%s172 + $0x1c] sm:$0xf] %v638
      %703 = vst [vmem:[%s172 + $0x20] sm:$0xf] %v639
      %704 = vst [vmem:[%s172 + $0x24] sm:$0xf] %v640
      %705 = vst [vmem:[%s172 + $0x28] sm:$0xf] %v641
      %706 = vst [vmem:[%s172 + $0x2c] sm:$0xf] %v642
      %707 = vst [vmem:[%s172 + $0x30] sm:$0xf] %v643
      %708 = vst [vmem:[%s172 + $0x34] sm:$0xf] %v644
      %709 = vst [vmem:[%s172 + $0x38] sm:$0xf] %v645
      %710 = vst [vmem:[%s172 + $0x3c] sm:$0xf] %v646
      %711 = vst [vmem:[%s172 + $0x40] sm:$0xf] %v647
      %712 = vst [vmem:[%s172 + $0x44] sm:$0xf] %v648
      %713 = vst [vmem:[%s172 + $0x48] sm:$0xf] %v649
      %714 = vst [vmem:[%s172 + $0x4c] sm:$0xf] %v650
      %715 = vst [vmem:[%s172 + $0x50] sm:$0xf] %v651
      %716 = vst [vmem:[%s172 + $0x54] sm:$0xf] %v652
      %717 = vst [vmem:[%s172 + $0x58] sm:$0xf] %v653
      %718 = vst [vmem:[%s172 + $0x5c] sm:$0xf] %v654
      %719 = vst [vmem:[%s172 + $0x60] sm:$0xf] %v655
      %720 = vst [vmem:[%s172 + $0x64] sm:$0xf] %v656
      %721 = vst [vmem:[%s172 + $0x68] sm:$0xf] %v657
      %722 = vst [vmem:[%s172 + $0x6c] sm:$0xf] %v658
      %723 = vst [vmem:[%s172 + $0x70] sm:$0xf] %v659
      %724 = vst [vmem:[%s172 + $0x74] sm:$0xf] %v660
      %725 = vst [vmem:[%s172 + $0x78] sm:$0xf] %v661
      %726 = vst [vmem:[%s172 + $0x7c] sm:$0xf] %v662
      %s727 = smul.u32 32, %s14
      %p728 = scmp.lt.s32.totalorder %s727, 63
      %s729 = scalar_select %p728, %s727, 63
      %s730 = smul.addr %s729, 4
      %s731 = scalar_lea.vmem %s3, %s730
      // Predicated region
      $region33: #{conv_bn_relu.1} parent=31 // pred_check
        %p732 = pneg %p100
      $region34: #{conv_bn_relu.1} parent=31 // pred_check_branch
        %734 = sbr.rel (%p732) target = $region36
      $region35: #{conv_bn_relu.1} parent=31 // pred_region
        %s735 = smul.u32 32, %s14
      $region36: #{conv_bn_relu.1} parent=31 // pred_fallthru
        _
    $region32: #{conv_bn_relu.1} parent=5 // pred_fallthru
      _
    %p736 = scmp.le.s32.totalorder 2, %s9
    // Predicated region
    $region37: #{conv_bn_relu.1} parent=5 // pred_check
      %p737 = pneg %p736
    $region38: #{conv_bn_relu.1} parent=5 // pred_check_branch
      %739 = sbr.rel (%p737) target = $region40
    $region39: #{conv_bn_relu.1} parent=5 // pred_region
      %s740 = ssub.s32 %s9, 2
      // Predicated region
      $region41: #{conv_bn_relu.1} parent=39 // pred_check
        %p741 = pneg %p106
      $region42: #{conv_bn_relu.1} parent=39 // pred_check_branch
        %743 = sbr.rel (%p741) target = $region44
      $region43: #{conv_bn_relu.1} parent=39 // pred_region
        %s744 = smul.u32 32, %s15
        %p745 = scmp.lt.s32.totalorder %s744, 63
        %s746 = scalar_select %p745, %s744, 63
        %s747 = smul.addr %s746, 4
        %s748 = scalar_lea.vmem %s3, %s747
      $region44: #{conv_bn_relu.1} parent=39 // pred_fallthru
        _
    $region40: #{conv_bn_relu.1} parent=5 // pred_fallthru
      _
  $region6: #{conv_bn_relu.1} parent=0 // loop_footer
    %s13 = sadd.s32 1, %s9
  $region7: #{conv_bn_relu.1} parent=0 // loop_footer_branch
    %8 = sbr.rel target = $region3
  $region8: #{conv_bn_relu.1} parent=0 // loop_exit
    _

</llo_original>
